<compile_context>
chip_gen: v7x
topology: tpu7x:2x2x1
jax: 0.10.0
libtpu: 0.0.40
codegen_flags: <defaults>
</compile_context>

<pallas_src>
import jax
import jax.numpy as jnp
from jax.experimental import pallas as pl
from jax.experimental.pallas import tpu as pltpu

_H1 = 128  # fused layer-1 width: 64 (coord_net) + 64 (relative_pos_net)


# --------------------------------------------------------------------------
# Kernel
# --------------------------------------------------------------------------
def coord_encoder_kernel(coords_ref, w1c_ref, wrel_ref, b1_ref, w2_ref, b2_ref,
                         out_ref):
    # coords_ref: (TB, N, 3)   tile of absolute coordinates (f32)
    # w1c_ref:    (3, 128)     row c = [w1[c] | r1[c]]      (fused layer-1 weight)
    # wrel_ref:   (3, 128)     row c = [0     | r1[c]]      (COM correction weight)
    # b1_ref:     (1, 128)     concat(b1, rb1)
    # w2_ref:     (128, Hp)    vstack(w2, r2), zero-padded lane-dense, bf16 on fast path
    # b2_ref:     (1, Hp)      b2 + rb2, zero-padded, f32
    # out_ref:    (TB, N, Hp)  f32 or bf16
    x = coords_ref[...]                                   # (TB, N, 3) f32

    # ---- fold the center of mass into a per-molecule layer-1 bias (computed
    #      once per molecule, not per atom): bias = b1f - sum_c com_c*[0|r1_c]
    com = jnp.mean(x, axis=1, keepdims=True)              # (TB, 1, 3)
    wrel = wrel_ref[...]                                   # (3, 128)
    bias = (b1_ref[...]
            - com[:, :, 0:1] * wrel[0:1]
            - com[:, :, 1:2] * wrel[1:2]
            - com[:, :, 2:3] * wrel[2:3])                  # (TB, 1, 128)

    # ---- layer 1: K is only 3 now, keep it off the MXU; 3 broadcast FMAs/atom.
    w1c = w1c_ref[...]                                     # (3, 128)
    h = (bias
         + x[:, :, 0:1] * w1c[0:1]
         + x[:, :, 1:2] * w1c[1:2]
         + x[:, :, 2:3] * w1c[2:3])                        # (TB, N, 128)
    h = jnp.maximum(h, 0.0)

    # ---- layer 2: single K=128 MXU matmul covering both sub-networks.
    # Keep h 3-D (no reshape) so no relayout is needed when N % 8 != 0;
    # bf16 inputs on the fast path, f32 accumulation.
    hm = h.astype(w2_ref.dtype)
    y = jnp.einsum("bnk,kh->bnh", hm, w2_ref[...],
                   preferred_element_type=jnp.float32)     # (TB, N, Hp) f32
    y = y + b2_ref[...]
    out_ref[...] = y.astype(out_ref.dtype)


# --------------------------------------------------------------------------
# Host-side parameter fusion
# --------------------------------------------------------------------------
def _fuse_params(params, hp, mxu_dtype):
    """Fuse the two MLPs; pad hidden_dim up to lane-dense hp (zeroed columns)."""
    w1, r1 = params["w1"], params["r1"]                    # (3, 64) each
    w1c = jnp.concatenate([w1, r1], axis=1)                # (3, 128)
    wrel = jnp.concatenate([jnp.zeros_like(w1), r1], axis=1)  # (3, 128)
    b1f = jnp.concatenate([params["b1"], params["rb1"]], axis=1)   # (1, 128)
    w2f = jnp.concatenate([params["w2"], params["r2"]], axis=0)    # (128, H)
    b2f = params["b2"] + params["rb2"]                             # (1, H)
    h = w2f.shape[1]
    if hp != h:   # zero the padded columns so garbage lanes never escape
        w2f = jnp.pad(w2f, ((0, 0), (0, hp - h)))
        b2f = jnp.pad(b2f, ((0, 0), (0, hp - h)))
    return w1c, wrel, b1f, w2f.astype(mxu_dtype), b2f


# --------------------------------------------------------------------------
# Tiling / VMEM sizing
# --------------------------------------------------------------------------
def _tpu_topology():
    """Best-effort (physical VMEM bytes, TensorCores-per-chip) with safe fallbacks."""
    vmem = 64 << 20   # conservative default (v7x-sized)
    ncores = 1
    try:
        info = pltpu.get_tpu_info()
        vmem = int(getattr(info, "vmem_capacity_bytes", vmem))
        for attr in ("num_cores", "tensorcore_count", "core_count"):
            v = getattr(info, attr, None)
            if v:
                ncores = int(v)
                break
    except Exception:
        pass
    return vmem, max(1, ncores)


def _vmem_per_block(N, Hp, out_itemsize, mxu_itemsize):
    """(per-molecule bytes, fixed bytes) of VMEM, including layout padding and
    live in-kernel temporaries (the old formula badly undercounted these)."""
    n_pad = pl.cdiv(N, 8) * 8
    per_b = (2 * n_pad * 128 * 4                 # coords tile (3 lanes pad to 128), dbl-buffered
             + 2 * n_pad * Hp * out_itemsize     # output tile, dbl-buffered
             + n_pad * 128 * (4 + mxu_itemsize)  # h (f32) + cast copy fed to the MXU
             + n_pad * Hp * 4                    # f32 accumulator before the output cast
             + 128 * 4)                          # per-molecule fused bias row
    fixed = 2 * 4 * (_H1 * Hp + Hp + 3 * 8 * _H1 + _H1)   # dbl-buffered weights (f32 upper bound)
    return per_b, fixed


def _choose_block_b(B, N, Hp, out_itemsize, mxu_itemsize, ncores, vmem_budget):
    """Returns (block_b, padded_B). Prefers divisors of B (no pad / no slice)."""
    per_b, fixed = _vmem_per_block(N, Hp, out_itemsize, mxu_itemsize)
    bb_max = int(max(1, min(B, (vmem_budget - fixed) // per_b)))

    divisors = [d for d in range(1, bb_max + 1) if B % d == 0]
    best = max(divisors)
    if ncores > 1:
        # v7x: prefer a grid-step count that's a multiple of the TC count so both
        # cores get balanced work (unless it would shrink the tile by > 2x).
        even = [d for d in divisors if (B // d) % ncores == 0]
        if even and 2 * max(even) >= best:
            best = max(even)
    if 4 * best >= bb_max:
        return best, B                      # exact tiling: no padding, no wrapper slice
    # B has no usable divisor (e.g. large prime): fall back to batch padding.
    steps = pl.cdiv(B, bb_max)
    if ncores > 1:
        steps = pl.cdiv(steps, ncores) * ncores
    bb = pl.cdiv(B, steps)
    return bb, pl.cdiv(B, bb) * bb


# --------------------------------------------------------------------------
# Wrapper
# --------------------------------------------------------------------------
def coordinate_encoder(coords, params, *, out_dtype=jnp.bfloat16, block_b=None):
    """coords: (B, N, 3) float32.  Returns (B, N, H) in `out_dtype`.

    out_dtype=jnp.bfloat16 is the performance path (halves output HBM traffic
    and MXU work); out_dtype=jnp.float32 matches the PyTorch module exactly.
    """
    B, N, _ = coords.shape
    H = params["w2"].shape[1]
    Hp = pl.cdiv(H, 128) * 128            # lane-dense output width
    out_dtype = jnp.dtype(out_dtype)
    mxu_dtype = jnp.bfloat16 if out_dtype == jnp.bfloat16 else jnp.float32
    mxu_itemsize = jnp.dtype(mxu_dtype).itemsize

    w1c, wrel, b1f, w2f, b2f = _fuse_params(params, Hp, mxu_dtype)

    vmem_phys, ncores = _tpu_topology()
    # ~24 MiB tile budget max (v7x only has 64 MiB physical VMEM per TC).
    budget = min(24 << 20, max(8 << 20, vmem_phys // 3))

    if block_b is None:
        block_b, Bp = _choose_block_b(B, N, Hp, out_dtype.itemsize,
                                      mxu_itemsize, ncores, budget)
    else:
        block_b = int(block_b)
        Bp = pl.cdiv(B, block_b) * block_b
    grid_b = Bp // block_b

    coords_p = coords if Bp == B else jnp.pad(coords, ((0, Bp - B), (0, 0), (0, 0)))

    # Explicit VMEM limit (v5e's default scoped limit is only 16 MiB).
    per_b, fixed = _vmem_per_block(N, Hp, out_dtype.itemsize, mxu_itemsize)
    est = fixed + per_b * block_b
    vmem_limit = int(min(max(est + (4 << 20), 16 << 20), int(vmem_phys * 0.75)))

    full = lambda shape: pl.BlockSpec(shape, lambda b: (0,) * len(shape))

    out = pl.pallas_call(
        coord_encoder_kernel,
        out_shape=jax.ShapeDtypeStruct((Bp, N, Hp), out_dtype),
        grid_spec=pltpu.PrefetchScalarGridSpec(
            num_scalar_prefetch=0,
            grid=(grid_b,),
            in_specs=[
                pl.BlockSpec((block_b, N, 3), lambda b: (b, 0, 0)),   # coords tile
                full((3, _H1)),      # fused layer-1 weight  [w1 | r1]
                full((3, _H1)),      # COM-correction weight [0  | r1]
                full((1, _H1)),      # fused layer-1 bias
                full((_H1, Hp)),     # fused layer-2 weight (bf16 on fast path)
                full((1, Hp)),       # fused layer-2 bias (f32)
            ],
            out_specs=pl.BlockSpec((block_b, N, Hp), lambda b: (b, 0, 0)),
        ),
        compiler_params=pltpu.CompilerParams(
            dimension_semantics=("parallel",),
            vmem_limit_bytes=vmem_limit),
    )(coords_p, w1c, wrel, b1f, w2f, b2f)

    if Bp != B:
        out = out[:B]
    if Hp != H:
        out = out[:, :, :H]
    return out


# --------------------------------------------------------------------------
# Params / reference
# --------------------------------------------------------------------------
def make_params(key, hidden_dim=128):
    ks = jax.random.split(key, 8)
    init = lambda k, shape, fan_in: (
        jax.random.uniform(k, shape, jnp.float32, -1.0, 1.0) / jnp.sqrt(fan_in))
    return {
        "w1":  init(ks[0], (3, 64), 3.0),
        "b1":  init(ks[1], (1, 64), 3.0),
        "w2":  init(ks[2], (64, hidden_dim), 64.0),
        "b2":  init(ks[3], (1, hidden_dim), 64.0),
        "r1":  init(ks[4], (3, 64), 3.0),
        "rb1": init(ks[5], (1, 64), 3.0),
        "r2":  init(ks[6], (64, hidden_dim), 64.0),
        "rb2": init(ks[7], (1, hidden_dim), 64.0),
    }


def coordinate_encoder_ref(coords, p):
    """Pure-JAX reference mirroring the PyTorch forward."""
    f1 = jnp.maximum(coords @ p["w1"] + p["b1"], 0.0) @ p["w2"] + p["b2"]
    rel = coords - coords.mean(axis=1, keepdims=True)
    f2 = jnp.maximum(rel @ p["r1"] + p["rb1"], 0.0) @ p["r2"] + p["rb2"]
    return f1 + f2


if __name__ == "__main__":
    key = jax.random.PRNGKey(0)
    k1, k2, k3, k4 = jax.random.split(key, 4)

    # Case 1: default hidden_dim=128 (naturally lane-dense), exact f32 path.
    params = make_params(k1, hidden_dim=128)
    coords = jax.random.normal(k2, (4, 8, 3), jnp.float32)
    out = jax.block_until_ready(
        coordinate_encoder(coords, params, out_dtype=jnp.float32))
    ref = coordinate_encoder_ref(coords, params)
    assert out.shape == (4, 8, 128) and out.dtype == jnp.float32
    assert jnp.allclose(out, ref, atol=1e-4, rtol=1e-4)

    # Case 1b: bf16 fast path (default) — relaxed tolerance for bf16 numerics.
    out_bf = jax.block_until_ready(coordinate_encoder(coords, params))
    assert out_bf.shape == (4, 8, 128) and out_bf.dtype == jnp.bfloat16
    assert jnp.allclose(out_bf.astype(jnp.float32), ref, atol=8e-2, rtol=5e-2)

    # Case 2: hidden_dim=32 — exercises the zero-padded lane-dense output
    # columns and the H != Hp slice path.
    params2 = make_params(k3, hidden_dim=32)
    coords2 = jax.random.normal(k4, (3, 8, 3), jnp.float32)
    out2 = jax.block_until_ready(
        coordinate_encoder(coords2, params2, out_dtype=jnp.float32))
    ref2 = coordinate_encoder_ref(coords2, params2)
    assert out2.shape == (3, 8, 32)
    assert jnp.allclose(out2, ref2, atol=1e-4, rtol=1e-4)

    # Case 3: force a block size that does NOT divide B — exercises the
    # multi-step grid, batch padding and the wrapper slice fallback.
    out3 = jax.block_until_ready(
        coordinate_encoder(coords, params, out_dtype=jnp.float32, block_b=3))
    assert out3.shape == (4, 8, 128)
    assert jnp.allclose(out3, ref, atol=1e-4, rtol=1e-4)

    print("KERNEL_OK")
</pallas_src>

<mosaic_0001>
module attributes {stable_mosaic.version = 11 : i64} {
  func.func @coord_encoder_kernel(%arg0: i32, %arg1: memref<4x8x3xf32, #tpu.memory_space<vmem>>, %arg2: memref<3x128xf32, #tpu.memory_space<vmem>>, %arg3: memref<3x128xf32, #tpu.memory_space<vmem>>, %arg4: memref<1x128xf32, #tpu.memory_space<vmem>>, %arg5: memref<128x128xf32, #tpu.memory_space<vmem>>, %arg6: memref<1x128xf32, #tpu.memory_space<vmem>>, %arg7: memref<4x8x128xf32, #tpu.memory_space<vmem>>) attributes {dimension_semantics = [#tpu.dimension_semantics<parallel>], iteration_bounds = array<i64: 1>, scalar_prefetch = 0 : i64, scratch_operands = 0 : i64, tpu.core_type = #tpu.core_type<tc>, window_params = [{transform_indices = @transform_0, window_bounds = array<i64: 4, 8, 3>}, {pipeline_mode = #tpu.pipeline_mode<synchronous>, transform_indices = @transform_1, window_bounds = array<i64: 3, 128>}, {pipeline_mode = #tpu.pipeline_mode<synchronous>, transform_indices = @transform_2, window_bounds = array<i64: 3, 128>}, {pipeline_mode = #tpu.pipeline_mode<synchronous>, transform_indices = @transform_3, window_bounds = array<i64: 1, 128>}, {pipeline_mode = #tpu.pipeline_mode<synchronous>, transform_indices = @transform_4, window_bounds = array<i64: 128, 128>}, {pipeline_mode = #tpu.pipeline_mode<synchronous>, transform_indices = @transform_5, window_bounds = array<i64: 1, 128>}, {transform_indices = @transform_6, window_bounds = array<i64: 4, 8, 128>}]} {
    %c0 = arith.constant 0 : index
    %c0_0 = arith.constant 0 : index
    %c0_1 = arith.constant 0 : index
    %0 = vector.load %arg1[%c0, %c0_0, %c0_1] : memref<4x8x3xf32, #tpu.memory_space<vmem>>, vector<4x8x3xf32>
    %cst = arith.constant dense<0.000000e+00> : vector<4x3xf32>
    %1 = vector.multi_reduction <add>, %0, %cst [1] : vector<4x8x3xf32> to vector<4x3xf32>
    %2 = vector.shape_cast %1 : vector<4x3xf32> to vector<4x1x3xf32>
    %cst_2 = arith.constant 8.000000e+00 : f32
    %3 = vector.broadcast %cst_2 : f32 to vector<4x1x3xf32>
    %4 = arith.divf %2, %3 : vector<4x1x3xf32>
    %c0_3 = arith.constant 0 : index
    %c0_4 = arith.constant 0 : index
    %5 = vector.load %arg3[%c0_3, %c0_4] : memref<3x128xf32, #tpu.memory_space<vmem>>, vector<3x128xf32>
    %c0_5 = arith.constant 0 : index
    %c0_6 = arith.constant 0 : index
    %6 = vector.load %arg4[%c0_5, %c0_6] : memref<1x128xf32, #tpu.memory_space<vmem>>, vector<1x128xf32>
    %7 = vector.extract_strided_slice %4 {offsets = [0, 0, 0], sizes = [4, 1, 1], strides = [1, 1, 1]} : vector<4x1x3xf32> to vector<4x1x1xf32>
    %8 = vector.extract_strided_slice %5 {offsets = [0, 0], sizes = [1, 128], strides = [1, 1]} : vector<3x128xf32> to vector<1x128xf32>
    %9 = vector.shape_cast %8 : vector<1x128xf32> to vector<1x1x128xf32>
    %10 = vector.broadcast %7 : vector<4x1x1xf32> to vector<4x1x128xf32>
    %11 = vector.broadcast %9 : vector<1x1x128xf32> to vector<4x1x128xf32>
    %12 = arith.mulf %10, %11 : vector<4x1x128xf32>
    %13 = vector.shape_cast %6 : vector<1x128xf32> to vector<1x1x128xf32>
    %14 = vector.broadcast %13 : vector<1x1x128xf32> to vector<4x1x128xf32>
    %15 = arith.subf %14, %12 : vector<4x1x128xf32>
    %16 = vector.extract_strided_slice %4 {offsets = [0, 0, 1], sizes = [4, 1, 1], strides = [1, 1, 1]} : vector<4x1x3xf32> to vector<4x1x1xf32>
    %17 = vector.extract_strided_slice %5 {offsets = [1, 0], sizes = [1, 128], strides = [1, 1]} : vector<3x128xf32> to vector<1x128xf32>
    %18 = vector.shape_cast %17 : vector<1x128xf32> to vector<1x1x128xf32>
    %19 = vector.broadcast %16 : vector<4x1x1xf32> to vector<4x1x128xf32>
    %20 = vector.broadcast %18 : vector<1x1x128xf32> to vector<4x1x128xf32>
    %21 = arith.mulf %19, %20 : vector<4x1x128xf32>
    %22 = arith.subf %15, %21 : vector<4x1x128xf32>
    %23 = vector.extract_strided_slice %4 {offsets = [0, 0, 2], sizes = [4, 1, 1], strides = [1, 1, 1]} : vector<4x1x3xf32> to vector<4x1x1xf32>
    %24 = vector.extract_strided_slice %5 {offsets = [2, 0], sizes = [1, 128], strides = [1, 1]} : vector<3x128xf32> to vector<1x128xf32>
    %25 = vector.shape_cast %24 : vector<1x128xf32> to vector<1x1x128xf32>
    %26 = vector.broadcast %23 : vector<4x1x1xf32> to vector<4x1x128xf32>
    %27 = vector.broadcast %25 : vector<1x1x128xf32> to vector<4x1x128xf32>
    %28 = arith.mulf %26, %27 : vector<4x1x128xf32>
    %29 = arith.subf %22, %28 : vector<4x1x128xf32>
    %c0_7 = arith.constant 0 : index
    %c0_8 = arith.constant 0 : index
    %30 = vector.load %arg2[%c0_7, %c0_8] : memref<3x128xf32, #tpu.memory_space<vmem>>, vector<3x128xf32>
    %31 = vector.extract_strided_slice %0 {offsets = [0, 0, 0], sizes = [4, 8, 1], strides = [1, 1, 1]} : vector<4x8x3xf32> to vector<4x8x1xf32>
    %32 = vector.extract_strided_slice %30 {offsets = [0, 0], sizes = [1, 128], strides = [1, 1]} : vector<3x128xf32> to vector<1x128xf32>
    %33 = vector.shape_cast %32 : vector<1x128xf32> to vector<1x1x128xf32>
    %34 = vector.broadcast %31 : vector<4x8x1xf32> to vector<4x8x128xf32>
    %35 = vector.broadcast %33 : vector<1x1x128xf32> to vector<4x8x128xf32>
    %36 = arith.mulf %34, %35 : vector<4x8x128xf32>
    %37 = vector.broadcast %29 : vector<4x1x128xf32> to vector<4x8x128xf32>
    %38 = arith.addf %37, %36 : vector<4x8x128xf32>
    %39 = vector.extract_strided_slice %0 {offsets = [0, 0, 1], sizes = [4, 8, 1], strides = [1, 1, 1]} : vector<4x8x3xf32> to vector<4x8x1xf32>
    %40 = vector.extract_strided_slice %30 {offsets = [1, 0], sizes = [1, 128], strides = [1, 1]} : vector<3x128xf32> to vector<1x128xf32>
    %41 = vector.shape_cast %40 : vector<1x128xf32> to vector<1x1x128xf32>
    %42 = vector.broadcast %39 : vector<4x8x1xf32> to vector<4x8x128xf32>
    %43 = vector.broadcast %41 : vector<1x1x128xf32> to vector<4x8x128xf32>
    %44 = arith.mulf %42, %43 : vector<4x8x128xf32>
    %45 = arith.addf %38, %44 : vector<4x8x128xf32>
    %46 = vector.extract_strided_slice %0 {offsets = [0, 0, 2], sizes = [4, 8, 1], strides = [1, 1, 1]} : vector<4x8x3xf32> to vector<4x8x1xf32>
    %47 = vector.extract_strided_slice %30 {offsets = [2, 0], sizes = [1, 128], strides = [1, 1]} : vector<3x128xf32> to vector<1x128xf32>
    %48 = vector.shape_cast %47 : vector<1x128xf32> to vector<1x1x128xf32>
    %49 = vector.broadcast %46 : vector<4x8x1xf32> to vector<4x8x128xf32>
    %50 = vector.broadcast %48 : vector<1x1x128xf32> to vector<4x8x128xf32>
    %51 = arith.mulf %49, %50 : vector<4x8x128xf32>
    %52 = arith.addf %45, %51 : vector<4x8x128xf32>
    %cst_9 = arith.constant 0.000000e+00 : f32
    %53 = vector.broadcast %cst_9 : f32 to vector<4x8x128xf32>
    %54 = arith.maximumf %52, %53 : vector<4x8x128xf32>
    %c0_10 = arith.constant 0 : index
    %c0_11 = arith.constant 0 : index
    %55 = vector.load %arg5[%c0_10, %c0_11] : memref<128x128xf32, #tpu.memory_space<vmem>>, vector<128x128xf32>
    "tpu.trace_start"() <{level = 10 : i32, message = "bnk,kh->bnh"}> : () -> ()
    %cst_12 = arith.constant dense<0.000000e+00> : vector<4x8x128xf32>
    %56 = tpu.matmul %54, %55, %cst_12 {dimension_numbers = #tpu.dot_dimension_numbers<[2], [0], [0, 1], [1], [0, 0, 0, 1, 1, 1], [], []>} : vector<4x8x128xf32>, vector<128x128xf32>, vector<4x8x128xf32> -> vector<4x8x128xf32>
    "tpu.trace_stop"() : () -> ()
    %c0_13 = arith.constant 0 : index
    %c0_14 = arith.constant 0 : index
    %57 = vector.load %arg6[%c0_13, %c0_14] : memref<1x128xf32, #tpu.memory_space<vmem>>, vector<1x128xf32>
    %58 = vector.shape_cast %57 : vector<1x128xf32> to vector<1x1x128xf32>
    %59 = vector.broadcast %58 : vector<1x1x128xf32> to vector<4x8x128xf32>
    %60 = arith.addf %56, %59 : vector<4x8x128xf32>
    %c0_15 = arith.constant 0 : index
    %c0_16 = arith.constant 0 : index
    %c0_17 = arith.constant 0 : index
    %61 = vector.load %arg7[%c0_15, %c0_16, %c0_17] : memref<4x8x128xf32, #tpu.memory_space<vmem>>, vector<4x8x128xf32>
    tpu.vector_store %arg7[%c0_15, %c0_16, %c0_17], %60 {strides = array<i32>} : memref<4x8x128xf32, #tpu.memory_space<vmem>>, vector<4x8x128xf32>,
    return
  }
  func.func @transform_0(%arg0: i32) -> (i32, i32, i32) {
    %c0_i32 = arith.constant 0 : i32
    %c0_i32_0 = arith.constant 0 : i32
    %c0_i32_1 = arith.constant 0 : i32
    return %arg0, %c0_i32, %c0_i32_0 : i32, i32, i32
  }
  func.func @transform_1(%arg0: i32) -> (i32, i32) {
    %c0_i32 = arith.constant 0 : i32
    %c0_i32_0 = arith.constant 0 : i32
    %c0_i32_1 = arith.constant 0 : i32
    return %c0_i32, %c0_i32_0 : i32, i32
  }
  func.func @transform_2(%arg0: i32) -> (i32, i32) {
    %c0_i32 = arith.constant 0 : i32
    %c0_i32_0 = arith.constant 0 : i32
    %c0_i32_1 = arith.constant 0 : i32
    return %c0_i32, %c0_i32_0 : i32, i32
  }
  func.func @transform_3(%arg0: i32) -> (i32, i32) {
    %c0_i32 = arith.constant 0 : i32
    %c0_i32_0 = arith.constant 0 : i32
    %c0_i32_1 = arith.constant 0 : i32
    return %c0_i32, %c0_i32_0 : i32, i32
  }
  func.func @transform_4(%arg0: i32) -> (i32, i32) {
    %c0_i32 = arith.constant 0 : i32
    %c0_i32_0 = arith.constant 0 : i32
    %c0_i32_1 = arith.constant 0 : i32
    return %c0_i32, %c0_i32_0 : i32, i32
  }
  func.func @transform_5(%arg0: i32) -> (i32, i32) {
    %c0_i32 = arith.constant 0 : i32
    %c0_i32_0 = arith.constant 0 : i32
    %c0_i32_1 = arith.constant 0 : i32
    return %c0_i32, %c0_i32_0 : i32, i32
  }
  func.func @transform_6(%arg0: i32) -> (i32, i32, i32) {
    %c0_i32 = arith.constant 0 : i32
    %c0_i32_0 = arith.constant 0 : i32
    %c0_i32_1 = arith.constant 0 : i32
    return %arg0, %c0_i32, %c0_i32_0 : i32, i32, i32
  }
}

</mosaic_0001>

<llo_original>
// kernel: tpu_custom_call.1
$region0: #{tpu_custom_call.1}
  #allocation0 [shape = 'u32[]', space=smem, size = 0x4, offset = 0x4, fixed_abs, tag = 'smem constant byte address 0x4 - core index']
  #allocation1 [shape = 'u32[144,128]{1,0:T(1,128)}', space=vmem, size = 0x12000, scoped, tag = 'internal scratch']
  %s0 = inlined_call_operand.vmem [shape: f32[4,8,3], index: 0, kind: input, shape index: {}]
  %s1 = inlined_call_operand.vmem [shape: f32[3,128], index: 1, kind: input, shape index: {}]
  %s2 = inlined_call_operand.vmem [shape: f32[3,128], index: 2, kind: input, shape index: {}]
  %s3 = inlined_call_operand.vmem [shape: f32[1,128], index: 3, kind: input, shape index: {}]
  %s4 = inlined_call_operand.hbm [shape: f32[128,128], index: 4, kind: input, shape index: {}]
  %s5 = inlined_call_operand.vmem [shape: f32[1,128], index: 5, kind: input, shape index: {}]
  %s6 = inlined_call_operand.hbm [shape: f32[4,8,128], index: 6, kind: output, shape index: {}]
  %s7 = sld [smem:[#allocation0]]
  $region38: #{tpu_custom_call.1} parent=0
    _
  %s9 = ssub.s32 1, %s7
  %s10 = scalar_select 0, %s9, %s7
  $region1: #{tpu_custom_call.1} parent=0
    #allocation2 [shape = 'u8[65536]{0}', space=vmem, size = 0x10000, scoped, tag = 'input window, operand 4, single buffered']
    #allocation3 [shape = 's32[1]{0}', space=sflag, size = 0x4, scoped, tag = 'scoped memory for tpu_custom_call.1']
    #allocation4 [shape = 's32[1]{0}', space=sflag, size = 0x4, scoped, tag = 'scoped memory for tpu_custom_call.1']
    #allocation5 [shape = 'u8[16384]{0}', space=vmem, size = 0x4000, scoped, tag = 'output window, operand 0, single buffered']
    %11 = vsyncpa [#allocation3], 0
    %12 = vsyncpa [#allocation4], 0
    // Predicated region
    $region2: #{tpu_custom_call.1} parent=1 // pred_check
      _
    $region3: #{tpu_custom_call.1} parent=1 // pred_check_branch
      %14 = sbr.rel (0) target = $region5
    $region4: #{tpu_custom_call.1} parent=1 // pred_region
      _
    $region5: #{tpu_custom_call.1} parent=1 // pred_fallthru
      _
    // Predicated region
    $region6: #{tpu_custom_call.1} parent=1 // pred_check
      _
    $region7: #{tpu_custom_call.1} parent=1 // pred_check_branch
      %16 = sbr.rel (0) target = $region9
    $region8: #{tpu_custom_call.1} parent=1 // pred_region
      _
    $region9: #{tpu_custom_call.1} parent=1 // pred_fallthru
      _
    // Predicated region
    $region10: #{tpu_custom_call.1} parent=1 // pred_check
      _
    $region11: #{tpu_custom_call.1} parent=1 // pred_check_branch
      %18 = sbr.rel (0) target = $region13
    $region12: #{tpu_custom_call.1} parent=1 // pred_region
      _
    $region13: #{tpu_custom_call.1} parent=1 // pred_fallthru
      _
    // Predicated region
    $region14: #{tpu_custom_call.1} parent=1 // pred_check
      _
    $region15: #{tpu_custom_call.1} parent=1 // pred_check_branch
      %20 = sbr.rel (0) target = $region17
    $region16: #{tpu_custom_call.1} parent=1 // pred_region
      _
    $region17: #{tpu_custom_call.1} parent=1 // pred_fallthru
      _
    // Predicated region
    $region18: #{tpu_custom_call.1} parent=1 // pred_check
      _
    $region19: #{tpu_custom_call.1} parent=1 // pred_check_branch
      %22 = sbr.rel (0) target = $region21
    $region20: #{tpu_custom_call.1} parent=1 // pred_region
      %s24 = ssub.s32 2048, 2048
      %25 = vsyncadd [#allocation3], %s24
      %s26 = sshll.u32 [#allocation2], 4
      %s27 = int_to_ptr.vmem [resolvable:$true] %s26
      %32 = dma.hbm_to_vmem [thread:$0]  %s4, 2048, %s27, [#allocation3], 128, 128, 8
    $region21: #{tpu_custom_call.1} parent=1 // pred_fallthru
      _
    // Predicated region
    $region22: #{tpu_custom_call.1} parent=1 // pred_check
      _
    $region23: #{tpu_custom_call.1} parent=1 // pred_check_branch
      %34 = sbr.rel (0) target = $region25
    $region24: #{tpu_custom_call.1} parent=1 // pred_region
      _
    $region25: #{tpu_custom_call.1} parent=1 // pred_fallthru
      _
    // Predicated region
    $region26: #{tpu_custom_call.1} parent=1 // pred_check
      _
    $region27: #{tpu_custom_call.1} parent=1 // pred_check_branch
      %36 = sbr.rel (0) target = $region29
    $region28: #{tpu_custom_call.1} parent=1 // pred_region
      %37 = dma.done [#allocation3], 2048
    $region29: #{tpu_custom_call.1} parent=1 // pred_fallthru
      _
    %v38 = vld [vmem:[%s0] sm:$0xff]
    %v39 = vld [vmem:[%s0 + $0x8] sm:$0xff]
    %v40 = vld [vmem:[%s0 + $0x10] sm:$0xff]
    %v41 = vld [vmem:[%s0 + $0x18] sm:$0xff]
    %vm42 = vcmask 23552
    %v43 = vsel %vm42, %v38, 0.0
    %v44 = vrot.slane %v43, 4
    %v45 = vadd.f32 %v43, %v44
    %v46 = vrot.slane %v45, 2
    %v47 = vadd.f32 %v45, %v46
    %v48 = vrot.slane %v47, 1
    %v49 = vadd.f32 %v47, %v48
    %v50 = vsel %vm42, %v39, 0.0
    %v51 = vrot.slane %v50, 4
    %v52 = vadd.f32 %v50, %v51
    %v53 = vrot.slane %v52, 2
    %v54 = vadd.f32 %v52, %v53
    %v55 = vrot.slane %v54, 1
    %v56 = vadd.f32 %v54, %v55
    %v57 = vsel %vm42, %v40, 0.0
    %v58 = vrot.slane %v57, 4
    %v59 = vadd.f32 %v57, %v58
    %v60 = vrot.slane %v59, 2
    %v61 = vadd.f32 %v59, %v60
    %v62 = vrot.slane %v61, 1
    %v63 = vadd.f32 %v61, %v62
    %v64 = vsel %vm42, %v41, 0.0
    %v65 = vrot.slane %v64, 4
    %v66 = vadd.f32 %v64, %v65
    %v67 = vrot.slane %v66, 2
    %v68 = vadd.f32 %v66, %v67
    %v69 = vrot.slane %v68, 1
    %v70 = vadd.f32 %v68, %v69
    %v71 = vrcp.pop 8.0
    %v72 = vmul.f32 %v49, %v71
    %v73 = vmul.f32 %v56, %v71
    %v74 = vmul.f32 %v63, %v71
    %v75 = vmul.f32 %v70, %v71
    %v76 = vld [vmem:[%s2] sm:$0x7]
    %v77 = vld [vmem:[%s3] sm:$0x1]
    %79 = vset.pattern.permute.xlu0 0
    %80 = vperm.xlu0 %79, %v72
    %v81 = vpop.permute.xlu0 %80
    %84 = vset.pattern.permute.xlu0 0
    %85 = vperm.xlu0 %84, %v73
    %v86 = vpop.permute.xlu0 %85
    %89 = vset.pattern.permute.xlu0 0
    %90 = vperm.xlu0 %89, %v74
    %v91 = vpop.permute.xlu0 %90
    %94 = vset.pattern.permute.xlu0 0
    %95 = vperm.xlu0 %94, %v75
    %v96 = vpop.permute.xlu0 %95
    %v98 = vmul.f32 %v81, %v76
    %v99 = vmul.f32 %v86, %v76
    %v100 = vmul.f32 %v91, %v76
    %v101 = vmul.f32 %v96, %v76
    %v102 = vsub.f32 %v77, %v98
    %v103 = vsub.f32 %v77, %v99
    %v104 = vsub.f32 %v77, %v100
    %v105 = vsub.f32 %v77, %v101
    %106 = vset.pattern.permute.xlu0 1
    %107 = vperm.xlu0 %106, %v72
    %v108 = vpop.permute.xlu0 %107
    %110 = vset.pattern.permute.xlu0 1
    %111 = vperm.xlu0 %110, %v73
    %v112 = vpop.permute.xlu0 %111
    %114 = vset.pattern.permute.xlu0 1
    %115 = vperm.xlu0 %114, %v74
    %v116 = vpop.permute.xlu0 %115
    %118 = vset.pattern.permute.xlu0 1
    %119 = vperm.xlu0 %118, %v75
    %v120 = vpop.permute.xlu0 %119
    %v122 = vmul.f32 %v108, %v76
    %v123 = vmul.f32 %v112, %v76
    %v124 = vmul.f32 %v116, %v76
    %v125 = vmul.f32 %v120, %v76
    %v131 = vunpack.c.l.s4 1966171168
    %v132 = vunpack.c.0.s8 %v131
    %v133 = vlaneseq
    %v134 = vshrl.u32 %v133, 7
    %v135 = vsub.s32 %v132, %v134
    %v136 = vrot.slane %v122, %v135
    %v137 = vcombine.high %v136, %v136
    %v139 = vunpack.c.l.s4 1966171168
    %v140 = vunpack.c.0.s8 %v139
    %v141 = vlaneseq
    %v142 = vshrl.u32 %v141, 7
    %v143 = vsub.s32 %v140, %v142
    %v144 = vrot.slane %v137, %v143
    %v146 = vunpack.c.l.s4 1966171168
    %v147 = vunpack.c.0.s8 %v146
    %v148 = vlaneseq
    %v149 = vshrl.u32 %v148, 7
    %v150 = vsub.s32 %v147, %v149
    %v151 = vrot.slane %v123, %v150
    %v152 = vcombine.high %v151, %v151
    %v154 = vunpack.c.l.s4 1966171168
    %v155 = vunpack.c.0.s8 %v154
    %v156 = vlaneseq
    %v157 = vshrl.u32 %v156, 7
    %v158 = vsub.s32 %v155, %v157
    %v159 = vrot.slane %v152, %v158
    %v161 = vunpack.c.l.s4 1966171168
    %v162 = vunpack.c.0.s8 %v161
    %v163 = vlaneseq
    %v164 = vshrl.u32 %v163, 7
    %v165 = vsub.s32 %v162, %v164
    %v166 = vrot.slane %v124, %v165
    %v167 = vcombine.high %v166, %v166
    %v169 = vunpack.c.l.s4 1966171168
    %v170 = vunpack.c.0.s8 %v169
    %v171 = vlaneseq
    %v172 = vshrl.u32 %v171, 7
    %v173 = vsub.s32 %v170, %v172
    %v174 = vrot.slane %v167, %v173
    %v176 = vunpack.c.l.s4 1966171168
    %v177 = vunpack.c.0.s8 %v176
    %v178 = vlaneseq
    %v179 = vshrl.u32 %v178, 7
    %v180 = vsub.s32 %v177, %v179
    %v181 = vrot.slane %v125, %v180
    %v182 = vcombine.high %v181, %v181
    %v184 = vunpack.c.l.s4 1966171168
    %v185 = vunpack.c.0.s8 %v184
    %v186 = vlaneseq
    %v187 = vshrl.u32 %v186, 7
    %v188 = vsub.s32 %v185, %v187
    %v189 = vrot.slane %v182, %v188
    %v194 = vsub.f32 %v102, %v144
    %v195 = vsub.f32 %v103, %v159
    %v196 = vsub.f32 %v104, %v174
    %v197 = vsub.f32 %v105, %v189
    %198 = vset.pattern.permute.xlu0 2
    %199 = vperm.xlu0 %198, %v72
    %v200 = vpop.permute.xlu0 %199
    %202 = vset.pattern.permute.xlu0 2
    %203 = vperm.xlu0 %202, %v73
    %v204 = vpop.permute.xlu0 %203
    %206 = vset.pattern.permute.xlu0 2
    %207 = vperm.xlu0 %206, %v74
    %v208 = vpop.permute.xlu0 %207
    %210 = vset.pattern.permute.xlu0 2
    %211 = vperm.xlu0 %210, %v75
    %v212 = vpop.permute.xlu0 %211
    %v214 = vmul.f32 %v200, %v76
    %v215 = vmul.f32 %v204, %v76
    %v216 = vmul.f32 %v208, %v76
    %v217 = vmul.f32 %v212, %v76
    %v223 = vunpack.c.l.s4 1966171168
    %v224 = vunpack.c.0.s8 %v223
    %v225 = vlaneseq
    %v226 = vshrl.u32 %v225, 7
    %v227 = vsub.s32 %v224, %v226
    %v228 = vrot.slane %v214, %v227
    %v230 = vunpack.c.l.s4 1966171168
    %v231 = vunpack.c.0.s8 %v230
    %v232 = vlaneseq
    %v233 = vshrl.u32 %v232, 7
    %v234 = vsub.s32 %v231, %v233
    %v235 = vrot.slane %v228, %v234
    %v236 = vcombine.high %v235, %v235
    %v238 = vunpack.c.l.s4 1966171168
    %v239 = vunpack.c.0.s8 %v238
    %v240 = vlaneseq
    %v241 = vshrl.u32 %v240, 7
    %v242 = vsub.s32 %v239, %v241
    %v243 = vrot.slane %v215, %v242
    %v245 = vunpack.c.l.s4 1966171168
    %v246 = vunpack.c.0.s8 %v245
    %v247 = vlaneseq
    %v248 = vshrl.u32 %v247, 7
    %v249 = vsub.s32 %v246, %v248
    %v250 = vrot.slane %v243, %v249
    %v251 = vcombine.high %v250, %v250
    %v253 = vunpack.c.l.s4 1966171168
    %v254 = vunpack.c.0.s8 %v253
    %v255 = vlaneseq
    %v256 = vshrl.u32 %v255, 7
    %v257 = vsub.s32 %v254, %v256
    %v258 = vrot.slane %v216, %v257
    %v260 = vunpack.c.l.s4 1966171168
    %v261 = vunpack.c.0.s8 %v260
    %v262 = vlaneseq
    %v263 = vshrl.u32 %v262, 7
    %v264 = vsub.s32 %v261, %v263
    %v265 = vrot.slane %v258, %v264
    %v266 = vcombine.high %v265, %v265
    %v268 = vunpack.c.l.s4 1966171168
    %v269 = vunpack.c.0.s8 %v268
    %v270 = vlaneseq
    %v271 = vshrl.u32 %v270, 7
    %v272 = vsub.s32 %v269, %v271
    %v273 = vrot.slane %v217, %v272
    %v275 = vunpack.c.l.s4 1966171168
    %v276 = vunpack.c.0.s8 %v275
    %v277 = vlaneseq
    %v278 = vshrl.u32 %v277, 7
    %v279 = vsub.s32 %v276, %v278
    %v280 = vrot.slane %v273, %v279
    %v281 = vcombine.high %v280, %v280
    %v286 = vsub.f32 %v194, %v236
    %v287 = vsub.f32 %v195, %v251
    %v288 = vsub.f32 %v196, %v266
    %v289 = vsub.f32 %v197, %v281
    %v290 = vld [vmem:[%s1] sm:$0x7]
    %292 = vset.pattern.permute.xlu0 0
    %293 = vperm.xlu0 %292, %v38
    %v294 = vpop.permute.xlu0 %293
    %297 = vset.pattern.permute.xlu0 0
    %298 = vperm.xlu0 %297, %v39
    %v299 = vpop.permute.xlu0 %298
    %302 = vset.pattern.permute.xlu0 0
    %303 = vperm.xlu0 %302, %v40
    %v304 = vpop.permute.xlu0 %303
    %307 = vset.pattern.permute.xlu0 0
    %308 = vperm.xlu0 %307, %v41
    %v309 = vpop.permute.xlu0 %308
    %v311 = vlaneseq
    %v312 = vshrl.u32 %v311, 7
    %v313 = vsub.s32 0, %v312
    %v314 = vrot.slane %v290, %v313
    %v315 = vmul.f32 %v294, %v314
    %v316 = vmul.f32 %v299, %v314
    %v317 = vmul.f32 %v304, %v314
    %v318 = vmul.f32 %v309, %v314
    %v323 = vlaneseq
    %v324 = vshrl.u32 %v323, 7
    %v325 = vsub.s32 0, %v324
    %v326 = vrot.slane %v286, %v325
    %v327 = vlaneseq
    %v328 = vshrl.u32 %v327, 7
    %v329 = vsub.s32 0, %v328
    %v330 = vrot.slane %v287, %v329
    %v331 = vlaneseq
    %v332 = vshrl.u32 %v331, 7
    %v333 = vsub.s32 0, %v332
    %v334 = vrot.slane %v288, %v333
    %v335 = vlaneseq
    %v336 = vshrl.u32 %v335, 7
    %v337 = vsub.s32 0, %v336
    %v338 = vrot.slane %v289, %v337
    %v343 = vadd.f32 %v326, %v315
    %v344 = vadd.f32 %v330, %v316
    %v345 = vadd.f32 %v334, %v317
    %v346 = vadd.f32 %v338, %v318
    %347 = vset.pattern.permute.xlu0 1
    %348 = vperm.xlu0 %347, %v38
    %v349 = vpop.permute.xlu0 %348
    %351 = vset.pattern.permute.xlu0 1
    %352 = vperm.xlu0 %351, %v39
    %v353 = vpop.permute.xlu0 %352
    %355 = vset.pattern.permute.xlu0 1
    %356 = vperm.xlu0 %355, %v40
    %v357 = vpop.permute.xlu0 %356
    %359 = vset.pattern.permute.xlu0 1
    %360 = vperm.xlu0 %359, %v41
    %v361 = vpop.permute.xlu0 %360
    %v363 = vlaneseq
    %v364 = vshrl.u32 %v363, 7
    %v365 = vsub.s32 1, %v364
    %v366 = vrot.slane %v290, %v365
    %v367 = vmul.f32 %v349, %v366
    %v368 = vmul.f32 %v353, %v366
    %v369 = vmul.f32 %v357, %v366
    %v370 = vmul.f32 %v361, %v366
    %v371 = vadd.f32 %v343, %v367
    %v372 = vadd.f32 %v344, %v368
    %v373 = vadd.f32 %v345, %v369
    %v374 = vadd.f32 %v346, %v370
    %375 = vset.pattern.permute.xlu0 2
    %376 = vperm.xlu0 %375, %v38
    %v377 = vpop.permute.xlu0 %376
    %379 = vset.pattern.permute.xlu0 2
    %380 = vperm.xlu0 %379, %v39
    %v381 = vpop.permute.xlu0 %380
    %383 = vset.pattern.permute.xlu0 2
    %384 = vperm.xlu0 %383, %v40
    %v385 = vpop.permute.xlu0 %384
    %387 = vset.pattern.permute.xlu0 2
    %388 = vperm.xlu0 %387, %v41
    %v389 = vpop.permute.xlu0 %388
    %v391 = vlaneseq
    %v392 = vshrl.u32 %v391, 7
    %v393 = vsub.s32 2, %v392
    %v394 = vrot.slane %v290, %v393
    %v395 = vmul.f32 %v377, %v394
    %v396 = vmul.f32 %v381, %v394
    %v397 = vmul.f32 %v385, %v394
    %v398 = vmul.f32 %v389, %v394
    %v399 = vadd.f32 %v371, %v395
    %v400 = vadd.f32 %v372, %v396
    %v401 = vadd.f32 %v373, %v397
    %v402 = vadd.f32 %v374, %v398
    %v403 = vmax.f32 %v399, 0.0
    %v404 = vmax.f32 %v400, 0.0
    %v405 = vmax.f32 %v401, 0.0
    %v406 = vmax.f32 %v402, 0.0
    %v407 = vld [vmem:[#allocation2] sm:$0xff]
    %v408 = vld [vmem:[#allocation2 + $0x8] sm:$0xff]
    %v409 = vld [vmem:[#allocation2 + $0x10] sm:$0xff]
    %v410 = vld [vmem:[#allocation2 + $0x18] sm:$0xff]
    %v411 = vld [vmem:[#allocation2 + $0x20] sm:$0xff]
    %v412 = vld [vmem:[#allocation2 + $0x28] sm:$0xff]
    %v413 = vld [vmem:[#allocation2 + $0x30] sm:$0xff]
    %v414 = vld [vmem:[#allocation2 + $0x38] sm:$0xff]
    %v415 = vld [vmem:[#allocation2 + $0x40] sm:$0xff]
    %v416 = vld [vmem:[#allocation2 + $0x48] sm:$0xff]
    %v417 = vld [vmem:[#allocation2 + $0x50] sm:$0xff]
    %v418 = vld [vmem:[#allocation2 + $0x58] sm:$0xff]
    %v419 = vld [vmem:[#allocation2 + $0x60] sm:$0xff]
    %v420 = vld [vmem:[#allocation2 + $0x68] sm:$0xff]
    %v421 = vld [vmem:[#allocation2 + $0x70] sm:$0xff]
    %v422 = vld [vmem:[#allocation2 + $0x78] sm:$0xff]
    %v423 = vld [vmem:[%s5] sm:$0x1]
    %v425 = vlaneseq
    %v426 = vshrl.u32 %v425, 7
    %v427 = vsub.s32 0, %v426
    %v428 = vrot.slane %v423, %v427
    %430 = vmatprep.subr.mxu0 0.0
    %431 = vmatpush1.msra.mxu0 %v407
    %432 = vmatprep.subr.mxu0 0.0
    %433 = vmatpush1.msra.mxu0 %v408
    %434 = vmatprep.subr.mxu0 0.0
    %435 = vmatpush1.msra.mxu0 %v409
    %436 = vmatprep.subr.mxu0 0.0
    %437 = vmatpush1.msra.mxu0 %v410
    %438 = vmatprep.subr.mxu0 0.0
    %439 = vmatpush1.msra.mxu0 %v411
    %440 = vmatprep.subr.mxu0 0.0
    %441 = vmatpush1.msra.mxu0 %v412
    %442 = vmatprep.subr.mxu0 0.0
    %443 = vmatpush1.msra.mxu0 %v413
    %444 = vmatprep.subr.mxu0 0.0
    %445 = vmatpush1.msra.mxu0 %v414
    %446 = vmatprep.subr.mxu0 0.0
    %447 = vmatpush1.msra.mxu0 %v415
    %448 = vmatprep.subr.mxu0 0.0
    %449 = vmatpush1.msra.mxu0 %v416
    %450 = vmatprep.subr.mxu0 0.0
    %451 = vmatpush1.msra.mxu0 %v417
    %452 = vmatprep.subr.mxu0 0.0
    %453 = vmatpush1.msra.mxu0 %v418
    %454 = vmatprep.subr.mxu0 0.0
    %455 = vmatpush1.msra.mxu0 %v419
    %456 = vmatprep.subr.mxu0 0.0
    %457 = vmatpush1.msra.mxu0 %v420
    %458 = vmatprep.subr.mxu0 0.0
    %459 = vmatpush1.msra.mxu0 %v421
    %460 = vmatprep.subr.mxu0 0.0
    %461 = vmatpush1.msra.mxu0 %v422
    %462 = vmatprep.subr.mxu0 0.0
    %463 = vmatpush1.msra.mxu0 0.0
    %464 = vmatprep.subr.mxu0 0.0
    %465 = vmatpush1.msra.mxu0 0.0
    %466 = vmatprep.subr.mxu0 0.0
    %467 = vmatpush1.msra.mxu0 0.0
    %468 = vmatprep.subr.mxu0 0.0
    %469 = vmatpush1.msra.mxu0 0.0
    %470 = vmatprep.subr.mxu0 0.0
    %471 = vmatpush1.msra.mxu0 0.0
    %472 = vmatprep.subr.mxu0 0.0
    %473 = vmatpush1.msra.mxu0 0.0
    %474 = vmatprep.subr.mxu0 0.0
    %475 = vmatpush1.msra.mxu0 0.0
    %476 = vmatprep.subr.mxu0 0.0
    %477 = vmatpush1.msra.mxu0 0.0
    %478 = vmatprep.subr.mxu0 0.0
    %479 = vmatpush1.msra.mxu0 0.0
    %480 = vmatprep.subr.mxu0 0.0
    %481 = vmatpush1.msra.mxu0 0.0
    %482 = vmatprep.subr.mxu0 0.0
    %483 = vmatpush1.msra.mxu0 0.0
    %484 = vmatprep.subr.mxu0 0.0
    %485 = vmatpush1.msra.mxu0 0.0
    %486 = vmatprep.subr.mxu0 0.0
    %487 = vmatpush1.msra.mxu0 0.0
    %488 = vmatprep.subr.mxu0 0.0
    %489 = vmatpush1.msra.mxu0 0.0
    %490 = vmatprep.subr.mxu0 0.0
    %491 = vmatpush1.msra.mxu0 0.0
    %492 = vmatprep.subr.mxu0 0.0
    %493 = vmatpush1.msra.mxu0 0.0
    %494 = vmatprep.mubr.f32.mxu0 0.0
    %495 = vmatmul.mubr.f32.gmra.mrb[0].mxu0 %v403
    %v496 = vpop.f32.mrb[0].mxu0
    %v497 = vadd.f32 %v428, %v496
    %v498 = vpop.f32.mrb[0].mxu0
    %499 = vmatprep.mubr.f32.mxu0 0.0
    %500 = vmatmul.mubr.f32.gmra.mrb[0].mxu0 %v404
    %v501 = vpop.f32.mrb[0].mxu0
    %v502 = vadd.f32 %v428, %v501
    %v503 = vpop.f32.mrb[0].mxu0
    %504 = vmatprep.mubr.f32.mxu0 0.0
    %505 = vmatmul.mubr.f32.gmra.mrb[0].mxu0 %v405
    %v506 = vpop.f32.mrb[0].mxu0
    %v507 = vadd.f32 %v428, %v506
    %v508 = vpop.f32.mrb[0].mxu0
    %509 = vmatprep.mubr.f32.mxu0 0.0
    %510 = vmatmul.mubr.f32.gmra.mrb[0].mxu0 %v406
    %v511 = vpop.f32.mrb[0].mxu0
    %v512 = vadd.f32 %v428, %v511
    %v513 = vpop.f32.mrb[0].mxu0
    %514 = vdwg.mxu0
    %515 = vst [vmem:[#allocation5] sm:$0xff] %v497
    %516 = vst [vmem:[#allocation5 + $0x8] sm:$0xff] %v502
    %517 = vst [vmem:[#allocation5 + $0x10] sm:$0xff] %v507
    %518 = vst [vmem:[#allocation5 + $0x18] sm:$0xff] %v512
    // Predicated region
    $region30: #{tpu_custom_call.1} parent=1 // pred_check
      _
    $region31: #{tpu_custom_call.1} parent=1 // pred_check_branch
      %520 = sbr.rel (0) target = $region33
    $region32: #{tpu_custom_call.1} parent=1 // pred_region
      %s522 = ssub.s32 512, 512
      %523 = vsyncadd [#allocation4], %s522
      %s524 = sshll.u32 [#allocation5], 4
      %s525 = int_to_ptr.vmem [resolvable:$true] %s524
      %530 = dma.vmem_to_hbm [thread:$0]  %s525, 512, %s6, [#allocation4], 128, 128, 8
    $region33: #{tpu_custom_call.1} parent=1 // pred_fallthru
      _
    // Predicated region
    $region34: #{tpu_custom_call.1} parent=1 // pred_check
      _
    $region35: #{tpu_custom_call.1} parent=1 // pred_check_branch
      %532 = sbr.rel (0) target = $region37
    $region36: #{tpu_custom_call.1} parent=1 // pred_region
      %533 = dma.done [#allocation4], 512
    $region37: #{tpu_custom_call.1} parent=1 // pred_fallthru
      _
    %534 = vsyncpa [#allocation3], 1
    %535 = vsyncpa [#allocation4], 1

</llo_original>
